<compile_context>
chip_gen: v7x
topology: tpu7x:2x2x1
jax: 0.10.0
libtpu: 0.0.40
codegen_flags: <defaults>
</compile_context>

<pallas_src>
import functools

import jax
import jax.numpy as jnp
import numpy as np
from jax.experimental import pallas as pl
from jax.experimental.pallas import tpu as pltpu


LOSS_NAMES = ("loss_ce", "class_error", "loss_bbox", "loss_giou", "iou")


# --------------------------------------------------------------------------
# Shared per-query math (traced inside the kernels)
# --------------------------------------------------------------------------
def _per_query_terms(logits, pbox, tbox, tcls, valid, num_classes, eos_coef):
    """Returns 7 rows of per-query terms, each [1, T] f32.

    logits [C1,T] f32, pbox/tbox [4,T] f32 (cxcywh), tcls [1,T] int32,
    valid: None (all valid) or [1,T] f32 (1.0 valid / 0.0 padded lane).
    """
    f32 = jnp.float32
    C1, T = logits.shape
    logits = logits.astype(f32)
    pbox = pbox.astype(f32)
    tbox = tbox.astype(f32)

    matched = tcls != num_classes
    if valid is not None:
        matched = jnp.logical_and(matched, valid > 0)
    m = matched.astype(f32)

    # ---- cross-entropy pieces (no [C1,N] logp temporary) ----
    if C1 == 2:
        lg0 = logits[0:1, :]
        lg1 = logits[1:2, :]
        mx = jnp.maximum(lg0, lg1)
        # 2-class closed form: one exp per query (EUP slot relief)
        lse = mx + jnp.log(1.0 + jnp.exp(-jnp.abs(lg0 - lg1)))
        tgt_logit = jnp.where(tcls == 0, lg0, lg1)
        pred = (lg1 > lg0).astype(jnp.int32)          # ties -> class 0 (== argmax)
    else:
        mx = jnp.max(logits, axis=0, keepdims=True)
        lse = mx + jnp.log(jnp.sum(jnp.exp(logits - mx), axis=0, keepdims=True))
        cls_iota = jax.lax.broadcasted_iota(jnp.int32, (C1, T), 0)
        onehot = (cls_iota == tcls).astype(f32)
        tgt_logit = jnp.sum(onehot * logits, axis=0, keepdims=True)
        pred = jnp.min(jnp.where(logits >= mx, cls_iota, C1), axis=0, keepdims=True)
    nll = lse - tgt_logit                              # [1, T]

    w = jnp.where(tcls == num_classes, f32(eos_coef), f32(1.0))
    if valid is not None:
        w = w * valid                                  # padded lanes: weight 0

    # ---- class_error numerator (matched queries only) ----
    correct = (pred == tcls).astype(f32) * m

    # ---- L1 box loss (matched only) ----
    l1_term = jnp.sum(jnp.abs(pbox - tbox), axis=0, keepdims=True) * m

    # ---- GIoU / IoU (matched only, NaN-safe select) ----
    scx, scy, sw, sh = pbox[0:1], pbox[1:2], pbox[2:3], pbox[3:4]
    tcx, tcy, tw, th = tbox[0:1], tbox[1:2], tbox[2:3], tbox[3:4]
    sx0, sy0, sx1, sy1 = scx - 0.5 * sw, scy - 0.5 * sh, scx + 0.5 * sw, scy + 0.5 * sh
    tx0, ty0, tx1, ty1 = tcx - 0.5 * tw, tcy - 0.5 * th, tcx + 0.5 * tw, tcy + 0.5 * th
    area_s = (sx1 - sx0) * (sy1 - sy0)
    area_t = (tx1 - tx0) * (ty1 - ty0)
    inter = (jnp.maximum(jnp.minimum(sx1, tx1) - jnp.maximum(sx0, tx0), 0.0)
             * jnp.maximum(jnp.minimum(sy1, ty1) - jnp.maximum(sy0, ty0), 0.0))
    union = area_s + area_t - inter
    iou = inter / union
    area_e = (jnp.maximum(jnp.maximum(sx1, tx1) - jnp.minimum(sx0, tx0), 0.0)
              * jnp.maximum(jnp.maximum(sy1, ty1) - jnp.minimum(sy0, ty0), 0.0))
    giou = iou - (area_e - union) / area_e
    giou_loss = jnp.where(matched, 1.0 - giou, 0.0)
    iou_m = jnp.where(matched, iou, 0.0)

    return (w * nll, w, correct, l1_term, giou_loss, iou_m, m)


def _finalize(sums, out_ref):
    """sums: list of 7 [1,1] f32 arrays -> final scalars, one unmasked (8,128) store."""
    f32 = jnp.float32
    sum_wnll, sum_w, sum_corr, sum_l1, sum_gl, sum_iou, sum_m = sums
    num_boxes = jnp.maximum(sum_m, f32(1.0))           # clamp(#matched, min=1)
    inv_nb = 1.0 / num_boxes

    loss_ce = sum_wnll / sum_w
    class_error = 100.0 - 100.0 * sum_corr * inv_nb
    loss_bbox = sum_l1 * inv_nb
    loss_giou = sum_gl * inv_nb
    iou_out = sum_iou * inv_nb

    lane = jax.lax.broadcasted_iota(jnp.int32, out_ref.shape, 1)
    out = jnp.where(lane == 0, loss_ce, f32(0.0))
    out = jnp.where(lane == 1, class_error, out)
    out = jnp.where(lane == 2, loss_bbox, out)
    out = jnp.where(lane == 3, loss_giou, out)
    out = jnp.where(lane == 4, iou_out, out)
    out_ref[...] = out


# --------------------------------------------------------------------------
# Kernels
# --------------------------------------------------------------------------
def _criterion_small_kernel(logits_ref, pbox_ref, tbox_ref, tcls_ref, out_ref,
                            *, num_classes, eos_coef):
    """Single-shot kernel (no grid) for N <= tile_n: one fused cross-lane reduce."""
    terms = _per_query_terms(logits_ref[...], pbox_ref[...], tbox_ref[...],
                             tcls_ref[...], None, num_classes, eos_coef)
    stacked = jnp.concatenate(terms, axis=0)           # [7, N]
    sums = jnp.sum(stacked, axis=1, keepdims=True)     # [7, 1]  (single XLU reduce)
    _finalize([sums[i:i + 1] for i in range(7)], out_ref)


def _criterion_tiled_kernel(logits_ref, pbox_ref, tbox_ref, tcls_ref, out_ref,
                            acc_ref, *, num_classes, eos_coef, n_valid, tile_n):
    """Grid over N ('arbitrary'): lane-wise partial sums in VMEM scratch, one epilogue reduce."""
    i = pl.program_id(0)

    @pl.when(i == 0)
    def _():
        acc_ref[...] = jnp.zeros_like(acc_ref)

    # mask lanes beyond the true N (host-side padding to a tile multiple)
    lane_idx = jax.lax.broadcasted_iota(jnp.int32, (1, tile_n), 1) + i * tile_n
    valid = (lane_idx < n_valid).astype(jnp.float32)

    terms = _per_query_terms(logits_ref[...], pbox_ref[...], tbox_ref[...],
                             tcls_ref[...], valid, num_classes, eos_coef)
    # plain VPU lane-wise accumulation; no per-tile concat / cross-lane reduce
    for r, t in enumerate(terms):
        acc_ref[r:r + 1, :] = acc_ref[r:r + 1, :] + t

    @pl.when(i == pl.num_programs(0) - 1)
    def _():
        sums = jnp.sum(acc_ref[...], axis=1, keepdims=True)   # [8, 1], row 7 is zero
        _finalize([sums[r:r + 1] for r in range(7)], out_ref)


# --------------------------------------------------------------------------
# Wrapper
# --------------------------------------------------------------------------
def set_criterion_pallas(logits_cn, pboxes_4n, tboxes_4n, tcls_n,
                         *, num_classes, eos_coef, tile_n=2048):
    """Criterion hot path.  Inputs (queries on the LANE axis, no repacking):
         logits_cn  [C1, N] f32   model class logits
         pboxes_4n  [4,  N] f32   predicted boxes (cx, cy, w, h)
         tboxes_4n  [4,  N] f32   dense target boxes (filler on unmatched rows)
         tcls_n     [N]     i32   dense target classes (num_classes = "no object")
       Returns a length-5 f32 vector [loss_ce, class_error, loss_bbox, loss_giou, iou].
    """
    C1, N = logits_cn.shape
    assert C1 == num_classes + 1
    logits_cn = logits_cn.astype(jnp.float32)
    pboxes_4n = pboxes_4n.astype(jnp.float32)
    tboxes_4n = tboxes_4n.astype(jnp.float32)
    tcls_2d = tcls_n.reshape(1, N).astype(jnp.int32)

    if N <= tile_n:
        # small / toy sizes: whole-array VMEM refs, no grid, no pipelining overhead
        kernel = functools.partial(_criterion_small_kernel,
                                   num_classes=num_classes, eos_coef=eos_coef)
        out = pl.pallas_call(
            kernel,
            out_shape=jax.ShapeDtypeStruct((8, 128), jnp.float32),
            in_specs=[pl.BlockSpec(memory_space=pltpu.MemorySpace.VMEM)] * 4,
            out_specs=pl.BlockSpec(memory_space=pltpu.MemorySpace.VMEM),
        )(logits_cn, pboxes_4n, tboxes_4n, tcls_2d)
    else:
        # production sizes: tile over N, accumulate lane-wise partial sums
        n_pad = pl.cdiv(N, tile_n) * tile_n
        pad = n_pad - N
        if pad:
            logits_cn = jnp.pad(logits_cn, ((0, 0), (0, pad)))
            pboxes_4n = jnp.pad(pboxes_4n, ((0, 0), (0, pad)), constant_values=0.5)
            tboxes_4n = jnp.pad(tboxes_4n, ((0, 0), (0, pad)), constant_values=0.5)
            tcls_2d = jnp.pad(tcls_2d, ((0, 0), (0, pad)), constant_values=num_classes)
        grid = (n_pad // tile_n,)
        kernel = functools.partial(_criterion_tiled_kernel,
                                   num_classes=num_classes, eos_coef=eos_coef,
                                   n_valid=N, tile_n=tile_n)
        out = pl.pallas_call(
            kernel,
            out_shape=jax.ShapeDtypeStruct((8, 128), jnp.float32),
            grid_spec=pltpu.PrefetchScalarGridSpec(
                num_scalar_prefetch=0, grid=grid,
                in_specs=[pl.BlockSpec((C1, tile_n), lambda i: (0, i)),
                          pl.BlockSpec((4, tile_n), lambda i: (0, i)),
                          pl.BlockSpec((4, tile_n), lambda i: (0, i)),
                          pl.BlockSpec((1, tile_n), lambda i: (0, i))],
                out_specs=pl.BlockSpec((8, 128), lambda i: (0, 0)),
                scratch_shapes=[pltpu.VMEM((8, tile_n), jnp.float32)]),
            compiler_params=pltpu.CompilerParams(
                dimension_semantics=("arbitrary",)),
        )(logits_cn, pboxes_4n, tboxes_4n, tcls_2d)

    # slice the packed output slab ONCE; unpack on host
    return out[0, :5]


# --------------------------------------------------------------------------
# Host-side glue: synthetic matcher + dense target construction (row-major
# [4,N]/[N] layouts -> no device transposes / concats before the kernel)
# --------------------------------------------------------------------------
def synthetic_matcher(B, Q, n_match_per_batch):
    # TODO(synk): the real TransT matcher is a separate module; deterministic stand-in.
    indices = []
    for b in range(B):
        src = [(b * 3 + 2 * j) % Q for j in range(n_match_per_batch)]
        tgt = [0] * n_match_per_batch
        indices.append((src, tgt))
    return indices


def build_dense_targets(targets, indices, B, Q, num_classes):
    N = B * Q
    tcls = np.full((N,), num_classes, dtype=np.int32)
    mmask = np.zeros((N,), dtype=np.float32)            # only used by the reference
    tboxes = np.full((4, N), 0.5, dtype=np.float32)     # [4, N]: kernel layout
    for b, (src, tgt) in enumerate(indices):
        for s, t in zip(src, tgt):
            q = b * Q + s
            tcls[q] = targets[b]["labels"][t]
            mmask[q] = 1.0
            tboxes[:, q] = targets[b]["boxes"][t]
    return tcls, mmask, tboxes


# --------------------------------------------------------------------------
# Pure-numpy reference (mirrors the PyTorch semantics)
# --------------------------------------------------------------------------
def reference_losses(logits, pboxes, tcls, mmask, tboxes, num_classes, eos_coef):
    logits = logits.astype(np.float64)
    mx = logits.max(axis=1, keepdims=True)
    lse = mx + np.log(np.exp(logits - mx).sum(axis=1, keepdims=True))
    logp = logits - lse
    N = logits.shape[0]
    nll = -logp[np.arange(N), tcls[:, 0]]
    w = np.where(tcls[:, 0] == num_classes, eos_coef, 1.0)
    loss_ce = (w * nll).sum() / w.sum()

    pred = logits.argmax(axis=1)
    m = mmask[:, 0]
    n_matched = max(m.sum(), 1.0)
    class_error = 100.0 - 100.0 * ((pred == tcls[:, 0]) * m).sum() / n_matched

    num_boxes = n_matched
    l1 = np.abs(pboxes - tboxes).sum(axis=1)
    loss_bbox = (l1 * m).sum() / num_boxes

    def to_xyxy(b):
        cx, cy, ww, hh = b[:, 0], b[:, 1], b[:, 2], b[:, 3]
        return cx - 0.5 * ww, cy - 0.5 * hh, cx + 0.5 * ww, cy + 0.5 * hh

    sx0, sy0, sx1, sy1 = to_xyxy(pboxes.astype(np.float64))
    tx0, ty0, tx1, ty1 = to_xyxy(tboxes.astype(np.float64))
    area_s = (sx1 - sx0) * (sy1 - sy0)
    area_t = (tx1 - tx0) * (ty1 - ty0)
    inter = (np.clip(np.minimum(sx1, tx1) - np.maximum(sx0, tx0), 0, None)
             * np.clip(np.minimum(sy1, ty1) - np.maximum(sy0, ty0), 0, None))
    union = area_s + area_t - inter
    iou = inter / union
    area_e = (np.clip(np.maximum(sx1, tx1) - np.minimum(sx0, tx0), 0, None)
              * np.clip(np.maximum(sy1, ty1) - np.minimum(sy0, ty0), 0, None))
    giou = iou - (area_e - union) / area_e
    loss_giou = ((1.0 - giou) * m).sum() / num_boxes
    iou_out = (iou * m).sum() / num_boxes
    return dict(loss_ce=loss_ce, class_error=class_error, loss_bbox=loss_bbox,
                loss_giou=loss_giou, iou=iou_out)


# --------------------------------------------------------------------------
if __name__ == "__main__":
    num_classes = 1          # single object tracking
    C1 = num_classes + 1
    eos_coef = 0.0625
    n_match = 4

    # ---------------- small case: B=2, Q=64 -> N=128 (no-grid path) ----------------
    B, Q = 2, 64
    N = B * Q
    key = jax.random.PRNGKey(0)
    k1, k2, k3 = jax.random.split(key, 3)

    # model outputs with queries already on the lane axis (no device repack needed)
    logits_cn = jax.random.normal(k1, (C1, N), dtype=jnp.float32)
    pboxes_4n = jax.nn.sigmoid(jax.random.normal(k2, (4, N), dtype=jnp.float32))

    gt = 0.2 + 0.5 * jax.random.uniform(k3, (B, 1, 4), dtype=jnp.float32)
    targets = [{"labels": np.zeros((1,), np.int32),
                "boxes": np.asarray(gt[b])} for b in range(B)]
    indices = synthetic_matcher(B, Q, n_match)
    tcls, mmask, tboxes_4n = build_dense_targets(targets, indices, B, Q, num_classes)

    vals = set_criterion_pallas(logits_cn, pboxes_4n,
                                jnp.asarray(tboxes_4n), jnp.asarray(tcls),
                                num_classes=num_classes, eos_coef=eos_coef)
    vals = np.asarray(jax.block_until_ready(vals))
    losses = dict(zip(LOSS_NAMES, vals))

    ref = reference_losses(np.asarray(logits_cn).T, np.asarray(pboxes_4n).T,
                           tcls.reshape(N, 1), mmask.reshape(N, 1),
                           tboxes_4n.T, num_classes, eos_coef)
    for k in LOSS_NAMES:
        np.testing.assert_allclose(losses[k], ref[k], rtol=1e-4, atol=1e-4)

    # ---------------- tiled case: B=4, Q=128 -> N=512, tile_n=256 (grid path) -------
    B2, Q2 = 4, 128
    N2 = B2 * Q2
    kk1, kk2, kk3 = jax.random.split(jax.random.PRNGKey(1), 3)
    logits2 = jax.random.normal(kk1, (C1, N2), dtype=jnp.float32)
    pboxes2 = jax.nn.sigmoid(jax.random.normal(kk2, (4, N2), dtype=jnp.float32))
    gt2 = 0.2 + 0.5 * jax.random.uniform(kk3, (B2, 1, 4), dtype=jnp.float32)
    targets2 = [{"labels": np.zeros((1,), np.int32),
                 "boxes": np.asarray(gt2[b])} for b in range(B2)]
    indices2 = synthetic_matcher(B2, Q2, n_match)
    tcls2, mmask2, tboxes2 = build_dense_targets(targets2, indices2, B2, Q2, num_classes)

    vals2 = set_criterion_pallas(logits2, pboxes2,
                                 jnp.asarray(tboxes2), jnp.asarray(tcls2),
                                 num_classes=num_classes, eos_coef=eos_coef,
                                 tile_n=256)
    vals2 = np.asarray(jax.block_until_ready(vals2))
    ref2 = reference_losses(np.asarray(logits2).T, np.asarray(pboxes2).T,
                            tcls2.reshape(N2, 1), mmask2.reshape(N2, 1),
                            tboxes2.T, num_classes, eos_coef)
    for i, k in enumerate(LOSS_NAMES):
        np.testing.assert_allclose(vals2[i], ref2[k], rtol=1e-4, atol=1e-4)

    print("KERNEL_OK")
</pallas_src>

<mosaic_0001>
module attributes {stable_mosaic.version = 11 : i64} {
  func.func @_criterion_small_kernel(%arg0: memref<2x128xf32, #tpu.memory_space<vmem>>, %arg1: memref<4x128xf32, #tpu.memory_space<vmem>>, %arg2: memref<4x128xf32, #tpu.memory_space<vmem>>, %arg3: memref<1x128xi32, #tpu.memory_space<vmem>>, %arg4: memref<8x128xf32, #tpu.memory_space<vmem>>) attributes {dimension_semantics = [], scalar_prefetch = 0 : i64, scratch_operands = 0 : i64, tpu.core_type = #tpu.core_type<tc>} {
    %c0 = arith.constant 0 : index
    %c0_0 = arith.constant 0 : index
    %0 = vector.load %arg0[%c0, %c0_0] : memref<2x128xf32, #tpu.memory_space<vmem>>, vector<2x128xf32>
    %c0_1 = arith.constant 0 : index
    %c0_2 = arith.constant 0 : index
    %1 = vector.load %arg1[%c0_1, %c0_2] : memref<4x128xf32, #tpu.memory_space<vmem>>, vector<4x128xf32>
    %c0_3 = arith.constant 0 : index
    %c0_4 = arith.constant 0 : index
    %2 = vector.load %arg2[%c0_3, %c0_4] : memref<4x128xf32, #tpu.memory_space<vmem>>, vector<4x128xf32>
    %c0_5 = arith.constant 0 : index
    %c0_6 = arith.constant 0 : index
    %3 = vector.load %arg3[%c0_5, %c0_6] : memref<1x128xi32, #tpu.memory_space<vmem>>, vector<1x128xi32>
    %c1_i32 = arith.constant 1 : i32
    %4 = vector.broadcast %c1_i32 : i32 to vector<1x128xi32>
    %5 = arith.cmpi ne, %3, %4 : vector<1x128xi32>
    %6 = arith.extui %5 : vector<1x128xi1> to vector<1x128xi32>
    %7 = arith.sitofp %6 : vector<1x128xi32> to vector<1x128xf32>
    %8 = vector.extract_strided_slice %0 {offsets = [0, 0], sizes = [1, 128], strides = [1, 1]} : vector<2x128xf32> to vector<1x128xf32>
    %9 = vector.extract_strided_slice %0 {offsets = [1, 0], sizes = [1, 128], strides = [1, 1]} : vector<2x128xf32> to vector<1x128xf32>
    %10 = arith.maximumf %8, %9 : vector<1x128xf32>
    %11 = arith.subf %8, %9 : vector<1x128xf32>
    %12 = math.absf %11 : vector<1x128xf32>
    %cst = arith.constant 0.000000e+00 : f32
    %13 = vector.broadcast %cst : f32 to vector<1x128xf32>
    %14 = arith.subf %13, %12 : vector<1x128xf32>
    %15 = math.exp %14 : vector<1x128xf32>
    %cst_7 = arith.constant 1.000000e+00 : f32
    %16 = vector.broadcast %cst_7 : f32 to vector<1x128xf32>
    %17 = arith.addf %16, %15 : vector<1x128xf32>
    %18 = math.log %17 : vector<1x128xf32>
    %19 = arith.addf %10, %18 : vector<1x128xf32>
    %c0_i32 = arith.constant 0 : i32
    %20 = vector.broadcast %c0_i32 : i32 to vector<1x128xi32>
    %21 = arith.cmpi eq, %3, %20 : vector<1x128xi32>
    %22 = arith.select %21, %8, %9 : vector<1x128xi1>, vector<1x128xf32>
    %23 = arith.cmpf ogt, %9, %8 : vector<1x128xf32>
    %24 = arith.extui %23 : vector<1x128xi1> to vector<1x128xi32>
    %25 = arith.subf %19, %22 : vector<1x128xf32>
    %c1_i32_8 = arith.constant 1 : i32
    %26 = vector.broadcast %c1_i32_8 : i32 to vector<1x128xi32>
    %27 = arith.cmpi eq, %3, %26 : vector<1x128xi32>
    %cst_9 = arith.constant 6.250000e-02 : f32
    %cst_10 = arith.constant 1.000000e+00 : f32
    %28 = vector.broadcast %cst_9 : f32 to vector<1x128xf32>
    %29 = vector.broadcast %cst_10 : f32 to vector<1x128xf32>
    %30 = arith.select %27, %28, %29 : vector<1x128xi1>, vector<1x128xf32>
    %31 = arith.cmpi eq, %24, %3 : vector<1x128xi32>
    %32 = arith.extui %31 : vector<1x128xi1> to vector<1x128xi32>
    %33 = arith.sitofp %32 : vector<1x128xi32> to vector<1x128xf32>
    %34 = arith.mulf %33, %7 : vector<1x128xf32>
    %35 = arith.subf %1, %2 : vector<4x128xf32>
    %36 = math.absf %35 : vector<4x128xf32>
    %cst_11 = arith.constant dense<0.000000e+00> : vector<128xf32>
    %37 = vector.multi_reduction <add>, %36, %cst_11 [0] : vector<4x128xf32> to vector<128xf32>
    %38 = vector.shape_cast %37 : vector<128xf32> to vector<1x128xf32>
    %39 = arith.mulf %38, %7 : vector<1x128xf32>
    %40 = vector.extract_strided_slice %1 {offsets = [0, 0], sizes = [1, 128], strides = [1, 1]} : vector<4x128xf32> to vector<1x128xf32>
    %41 = vector.extract_strided_slice %1 {offsets = [1, 0], sizes = [1, 128], strides = [1, 1]} : vector<4x128xf32> to vector<1x128xf32>
    %42 = vector.extract_strided_slice %1 {offsets = [2, 0], sizes = [1, 128], strides = [1, 1]} : vector<4x128xf32> to vector<1x128xf32>
    %43 = vector.extract_strided_slice %1 {offsets = [3, 0], sizes = [1, 128], strides = [1, 1]} : vector<4x128xf32> to vector<1x128xf32>
    %44 = vector.extract_strided_slice %2 {offsets = [0, 0], sizes = [1, 128], strides = [1, 1]} : vector<4x128xf32> to vector<1x128xf32>
    %45 = vector.extract_strided_slice %2 {offsets = [1, 0], sizes = [1, 128], strides = [1, 1]} : vector<4x128xf32> to vector<1x128xf32>
    %46 = vector.extract_strided_slice %2 {offsets = [2, 0], sizes = [1, 128], strides = [1, 1]} : vector<4x128xf32> to vector<1x128xf32>
    %47 = vector.extract_strided_slice %2 {offsets = [3, 0], sizes = [1, 128], strides = [1, 1]} : vector<4x128xf32> to vector<1x128xf32>
    %cst_12 = arith.constant 5.000000e-01 : f32
    %48 = vector.broadcast %cst_12 : f32 to vector<1x128xf32>
    %49 = arith.mulf %48, %42 : vector<1x128xf32>
    %50 = arith.subf %40, %49 : vector<1x128xf32>
    %cst_13 = arith.constant 5.000000e-01 : f32
    %51 = vector.broadcast %cst_13 : f32 to vector<1x128xf32>
    %52 = arith.mulf %51, %43 : vector<1x128xf32>
    %53 = arith.subf %41, %52 : vector<1x128xf32>
    %cst_14 = arith.constant 5.000000e-01 : f32
    %54 = vector.broadcast %cst_14 : f32 to vector<1x128xf32>
    %55 = arith.mulf %54, %42 : vector<1x128xf32>
    %56 = arith.addf %40, %55 : vector<1x128xf32>
    %cst_15 = arith.constant 5.000000e-01 : f32
    %57 = vector.broadcast %cst_15 : f32 to vector<1x128xf32>
    %58 = arith.mulf %57, %43 : vector<1x128xf32>
    %59 = arith.addf %41, %58 : vector<1x128xf32>
    %cst_16 = arith.constant 5.000000e-01 : f32
    %60 = vector.broadcast %cst_16 : f32 to vector<1x128xf32>
    %61 = arith.mulf %60, %46 : vector<1x128xf32>
    %62 = arith.subf %44, %61 : vector<1x128xf32>
    %cst_17 = arith.constant 5.000000e-01 : f32
    %63 = vector.broadcast %cst_17 : f32 to vector<1x128xf32>
    %64 = arith.mulf %63, %47 : vector<1x128xf32>
    %65 = arith.subf %45, %64 : vector<1x128xf32>
    %cst_18 = arith.constant 5.000000e-01 : f32
    %66 = vector.broadcast %cst_18 : f32 to vector<1x128xf32>
    %67 = arith.mulf %66, %46 : vector<1x128xf32>
    %68 = arith.addf %44, %67 : vector<1x128xf32>
    %cst_19 = arith.constant 5.000000e-01 : f32
    %69 = vector.broadcast %cst_19 : f32 to vector<1x128xf32>
    %70 = arith.mulf %69, %47 : vector<1x128xf32>
    %71 = arith.addf %45, %70 : vector<1x128xf32>
    %72 = arith.subf %56, %50 : vector<1x128xf32>
    %73 = arith.subf %59, %53 : vector<1x128xf32>
    %74 = arith.mulf %72, %73 : vector<1x128xf32>
    %75 = arith.subf %68, %62 : vector<1x128xf32>
    %76 = arith.subf %71, %65 : vector<1x128xf32>
    %77 = arith.mulf %75, %76 : vector<1x128xf32>
    %78 = arith.minimumf %56, %68 : vector<1x128xf32>
    %79 = arith.maximumf %50, %62 : vector<1x128xf32>
    %80 = arith.subf %78, %79 : vector<1x128xf32>
    %cst_20 = arith.constant 0.000000e+00 : f32
    %81 = vector.broadcast %cst_20 : f32 to vector<1x128xf32>
    %82 = arith.maximumf %80, %81 : vector<1x128xf32>
    %83 = arith.minimumf %59, %71 : vector<1x128xf32>
    %84 = arith.maximumf %53, %65 : vector<1x128xf32>
    %85 = arith.subf %83, %84 : vector<1x128xf32>
    %cst_21 = arith.constant 0.000000e+00 : f32
    %86 = vector.broadcast %cst_21 : f32 to vector<1x128xf32>
    %87 = arith.maximumf %85, %86 : vector<1x128xf32>
    %88 = arith.mulf %82, %87 : vector<1x128xf32>
    %89 = arith.addf %74, %77 : vector<1x128xf32>
    %90 = arith.subf %89, %88 : vector<1x128xf32>
    %91 = arith.divf %88, %90 : vector<1x128xf32>
    %92 = arith.maximumf %56, %68 : vector<1x128xf32>
    %93 = arith.minimumf %50, %62 : vector<1x128xf32>
    %94 = arith.subf %92, %93 : vector<1x128xf32>
    %cst_22 = arith.constant 0.000000e+00 : f32
    %95 = vector.broadcast %cst_22 : f32 to vector<1x128xf32>
    %96 = arith.maximumf %94, %95 : vector<1x128xf32>
    %97 = arith.maximumf %59, %71 : vector<1x128xf32>
    %98 = arith.minimumf %53, %65 : vector<1x128xf32>
    %99 = arith.subf %97, %98 : vector<1x128xf32>
    %cst_23 = arith.constant 0.000000e+00 : f32
    %100 = vector.broadcast %cst_23 : f32 to vector<1x128xf32>
    %101 = arith.maximumf %99, %100 : vector<1x128xf32>
    %102 = arith.mulf %96, %101 : vector<1x128xf32>
    %103 = arith.subf %102, %90 : vector<1x128xf32>
    %104 = arith.divf %103, %102 : vector<1x128xf32>
    %105 = arith.subf %91, %104 : vector<1x128xf32>
    %cst_24 = arith.constant 1.000000e+00 : f32
    %106 = vector.broadcast %cst_24 : f32 to vector<1x128xf32>
    %107 = arith.subf %106, %105 : vector<1x128xf32>
    %cst_25 = arith.constant 0.000000e+00 : f32
    %108 = vector.broadcast %cst_25 : f32 to vector<1x128xf32>
    %109 = arith.select %5, %107, %108 : vector<1x128xi1>, vector<1x128xf32>
    %cst_26 = arith.constant 0.000000e+00 : f32
    %110 = vector.broadcast %cst_26 : f32 to vector<1x128xf32>
    %111 = arith.select %5, %91, %110 : vector<1x128xi1>, vector<1x128xf32>
    %112 = arith.mulf %30, %25 : vector<1x128xf32>
    %113 = tpu.concatenate %112, %30, %34, %39, %109, %111, %7 in 0 : vector<1x128xf32>, vector<1x128xf32>, vector<1x128xf32>, vector<1x128xf32>, vector<1x128xf32>, vector<1x128xf32>, vector<1x128xf32> -> vector<7x128xf32>
    %cst_27 = arith.constant dense<0.000000e+00> : vector<7xf32>
    %114 = vector.multi_reduction <add>, %113, %cst_27 [1] : vector<7x128xf32> to vector<7xf32>
    %115 = vector.shape_cast %114 : vector<7xf32> to vector<7x1xf32>
    %116 = vector.extract_strided_slice %115 {offsets = [0, 0], sizes = [1, 1], strides = [1, 1]} : vector<7x1xf32> to vector<1x1xf32>
    %117 = vector.extract_strided_slice %115 {offsets = [1, 0], sizes = [1, 1], strides = [1, 1]} : vector<7x1xf32> to vector<1x1xf32>
    %118 = vector.extract_strided_slice %115 {offsets = [2, 0], sizes = [1, 1], strides = [1, 1]} : vector<7x1xf32> to vector<1x1xf32>
    %119 = vector.extract_strided_slice %115 {offsets = [3, 0], sizes = [1, 1], strides = [1, 1]} : vector<7x1xf32> to vector<1x1xf32>
    %120 = vector.extract_strided_slice %115 {offsets = [4, 0], sizes = [1, 1], strides = [1, 1]} : vector<7x1xf32> to vector<1x1xf32>
    %121 = vector.extract_strided_slice %115 {offsets = [5, 0], sizes = [1, 1], strides = [1, 1]} : vector<7x1xf32> to vector<1x1xf32>
    %122 = vector.extract_strided_slice %115 {offsets = [6, 0], sizes = [1, 1], strides = [1, 1]} : vector<7x1xf32> to vector<1x1xf32>
    %cst_28 = arith.constant 1.000000e+00 : f32
    %123 = vector.broadcast %cst_28 : f32 to vector<1x1xf32>
    %124 = arith.maximumf %122, %123 : vector<1x1xf32>
    %cst_29 = arith.constant 1.000000e+00 : f32
    %125 = vector.broadcast %cst_29 : f32 to vector<1x1xf32>
    %126 = arith.divf %125, %124 : vector<1x1xf32>
    %127 = arith.divf %116, %117 : vector<1x1xf32>
    %cst_30 = arith.constant 1.000000e+02 : f32
    %128 = vector.broadcast %cst_30 : f32 to vector<1x1xf32>
    %129 = arith.mulf %128, %118 : vector<1x1xf32>
    %130 = arith.mulf %129, %126 : vector<1x1xf32>
    %cst_31 = arith.constant 1.000000e+02 : f32
    %131 = vector.broadcast %cst_31 : f32 to vector<1x1xf32>
    %132 = arith.subf %131, %130 : vector<1x1xf32>
    %133 = arith.mulf %119, %126 : vector<1x1xf32>
    %134 = arith.mulf %120, %126 : vector<1x1xf32>
    %135 = arith.mulf %121, %126 : vector<1x1xf32>
    %136 = tpu.iota {dimensions = array<i32: 1>} : vector<8x128xi32>
    %c0_i32_32 = arith.constant 0 : i32
    %137 = vector.broadcast %c0_i32_32 : i32 to vector<8x128xi32>
    %138 = arith.cmpi eq, %136, %137 : vector<8x128xi32>
    %cst_33 = arith.constant 0.000000e+00 : f32
    %139 = vector.shape_cast %127 : vector<1x1xf32> to vector<1x1xf32>
    %140 = vector.broadcast %139 : vector<1x1xf32> to vector<8x128xf32>
    %141 = vector.broadcast %cst_33 : f32 to vector<8x128xf32>
    %142 = arith.select %138, %140, %141 : vector<8x128xi1>, vector<8x128xf32>
    %c1_i32_34 = arith.constant 1 : i32
    %143 = vector.broadcast %c1_i32_34 : i32 to vector<8x128xi32>
    %144 = arith.cmpi eq, %136, %143 : vector<8x128xi32>
    %145 = vector.shape_cast %132 : vector<1x1xf32> to vector<1x1xf32>
    %146 = vector.broadcast %145 : vector<1x1xf32> to vector<8x128xf32>
    %147 = arith.select %144, %146, %142 : vector<8x128xi1>, vector<8x128xf32>
    %c2_i32 = arith.constant 2 : i32
    %148 = vector.broadcast %c2_i32 : i32 to vector<8x128xi32>
    %149 = arith.cmpi eq, %136, %148 : vector<8x128xi32>
    %150 = vector.shape_cast %133 : vector<1x1xf32> to vector<1x1xf32>
    %151 = vector.broadcast %150 : vector<1x1xf32> to vector<8x128xf32>
    %152 = arith.select %149, %151, %147 : vector<8x128xi1>, vector<8x128xf32>
    %c3_i32 = arith.constant 3 : i32
    %153 = vector.broadcast %c3_i32 : i32 to vector<8x128xi32>
    %154 = arith.cmpi eq, %136, %153 : vector<8x128xi32>
    %155 = vector.shape_cast %134 : vector<1x1xf32> to vector<1x1xf32>
    %156 = vector.broadcast %155 : vector<1x1xf32> to vector<8x128xf32>
    %157 = arith.select %154, %156, %152 : vector<8x128xi1>, vector<8x128xf32>
    %c4_i32 = arith.constant 4 : i32
    %158 = vector.broadcast %c4_i32 : i32 to vector<8x128xi32>
    %159 = arith.cmpi eq, %136, %158 : vector<8x128xi32>
    %160 = vector.shape_cast %135 : vector<1x1xf32> to vector<1x1xf32>
    %161 = vector.broadcast %160 : vector<1x1xf32> to vector<8x128xf32>
    %162 = arith.select %159, %161, %157 : vector<8x128xi1>, vector<8x128xf32>
    %c0_35 = arith.constant 0 : index
    %c0_36 = arith.constant 0 : index
    %163 = vector.load %arg4[%c0_35, %c0_36] : memref<8x128xf32, #tpu.memory_space<vmem>>, vector<8x128xf32>
    tpu.vector_store %arg4[%c0_35, %c0_36], %162 {strides = array<i32>} : memref<8x128xf32, #tpu.memory_space<vmem>>, vector<8x128xf32>,
    return
  }
}

</mosaic_0001>

<llo_original>
// kernel: tpu_custom_call.1
$region0: #{tpu_custom_call.1}
  #allocation0 [shape = 'u32[]', space=smem, size = 0x4, offset = 0x4, fixed_abs, tag = 'smem constant byte address 0x4 - core index']
  #allocation1 [shape = 'u32[144,128]{1,0:T(1,128)}', space=vmem, size = 0x12000, scoped, tag = 'internal scratch']
  %s0 = inlined_call_operand.hbm [shape: f32[2,128], index: 0, kind: input, shape index: {}]
  %s1 = inlined_call_operand.hbm [shape: f32[4,128], index: 1, kind: input, shape index: {}]
  %s2 = inlined_call_operand.vmem [shape: f32[4,128], index: 2, kind: input, shape index: {}]
  %s3 = inlined_call_operand.vmem [shape: s32[1,128], index: 3, kind: input, shape index: {}]
  %s4 = inlined_call_operand.hbm [shape: f32[8,128], index: 4, kind: output, shape index: {}]
  %s5 = sld [smem:[#allocation0]]
  $region34: #{tpu_custom_call.1} parent=0
    _
  %s7 = ssub.s32 1, %s5
  %s8 = scalar_select 0, %s7, %s5
  $region1: #{tpu_custom_call.1} parent=0
    #allocation2 [shape = 'u8[1024]{0}', space=vmem, size = 0x400, scoped, tag = 'input window, operand 0, single buffered']
    #allocation3 [shape = 's32[1]{0}', space=sflag, size = 0x4, scoped, tag = 'scoped memory for tpu_custom_call.1']
    #allocation4 [shape = 's32[1]{0}', space=sflag, size = 0x4, scoped, tag = 'scoped memory for tpu_custom_call.1']
    #allocation5 [shape = 'u8[2048]{0}', space=vmem, size = 0x800, scoped, tag = 'input window, operand 1, single buffered']
    #allocation6 [shape = 's32[1]{0}', space=sflag, size = 0x4, scoped, tag = 'scoped memory for tpu_custom_call.1']
    #allocation7 [shape = 'u8[4096]{0}', space=vmem, size = 0x1000, scoped, tag = 'output window, operand 0, single buffered']
    %9 = vsyncpa [#allocation3], 0
    %10 = vsyncpa [#allocation6], 0
    %11 = vsyncpa [#allocation4], 0
    // Predicated region
    $region2: #{tpu_custom_call.1} parent=1 // pred_check
      _
    $region3: #{tpu_custom_call.1} parent=1 // pred_check_branch
      %13 = sbr.rel (0) target = $region5
    $region4: #{tpu_custom_call.1} parent=1 // pred_region
      %s15 = ssub.s32 32, 32
      %16 = vsyncadd [#allocation3], %s15
      %s18 = sshll.u32 [#allocation2], 4
      %s19 = int_to_ptr.vmem [resolvable:$true] %s18
      %21 = dma.hbm_to_vmem [thread:$0]  %s0, 32, %s19, [#allocation3]
    $region5: #{tpu_custom_call.1} parent=1 // pred_fallthru
      _
    // Predicated region
    $region6: #{tpu_custom_call.1} parent=1 // pred_check
      _
    $region7: #{tpu_custom_call.1} parent=1 // pred_check_branch
      %23 = sbr.rel (0) target = $region9
    $region8: #{tpu_custom_call.1} parent=1 // pred_region
      %s25 = ssub.s32 64, 64
      %26 = vsyncadd [#allocation6], %s25
      %s28 = sshll.u32 [#allocation5], 4
      %s29 = int_to_ptr.vmem [resolvable:$true] %s28
      %31 = dma.hbm_to_vmem [thread:$0]  %s1, 64, %s29, [#allocation6]
    $region9: #{tpu_custom_call.1} parent=1 // pred_fallthru
      _
    // Predicated region
    $region10: #{tpu_custom_call.1} parent=1 // pred_check
      _
    $region11: #{tpu_custom_call.1} parent=1 // pred_check_branch
      %33 = sbr.rel (0) target = $region13
    $region12: #{tpu_custom_call.1} parent=1 // pred_region
      _
    $region13: #{tpu_custom_call.1} parent=1 // pred_fallthru
      _
    // Predicated region
    $region14: #{tpu_custom_call.1} parent=1 // pred_check
      _
    $region15: #{tpu_custom_call.1} parent=1 // pred_check_branch
      %35 = sbr.rel (0) target = $region17
    $region16: #{tpu_custom_call.1} parent=1 // pred_region
      _
    $region17: #{tpu_custom_call.1} parent=1 // pred_fallthru
      _
    // Predicated region
    $region18: #{tpu_custom_call.1} parent=1 // pred_check
      _
    $region19: #{tpu_custom_call.1} parent=1 // pred_check_branch
      %37 = sbr.rel (0) target = $region21
    $region20: #{tpu_custom_call.1} parent=1 // pred_region
      %38 = dma.done [#allocation3], 32
    $region21: #{tpu_custom_call.1} parent=1 // pred_fallthru
      _
    // Predicated region
    $region22: #{tpu_custom_call.1} parent=1 // pred_check
      _
    $region23: #{tpu_custom_call.1} parent=1 // pred_check_branch
      %40 = sbr.rel (0) target = $region25
    $region24: #{tpu_custom_call.1} parent=1 // pred_region
      %41 = dma.done [#allocation6], 64
    $region25: #{tpu_custom_call.1} parent=1 // pred_fallthru
      _
    %v42 = vld [vmem:[#allocation2] sm:$0x3]
    %v43 = vld [vmem:[#allocation5] sm:$0xf]
    %v44 = vld [vmem:[%s2] sm:$0xf]
    %v45 = vld [vmem:[%s3] sm:$0x1]
    %vm46 = vcmp.ne.s32.totalorder %v45, 1
    %v47 = vsel %vm46, 1, 0
    %v48 = vcvt.s32.f32 %v47
    %v50 = vrot.slane %v42, 1
    %v52 = vmax.f32 %v42, %v50
    %v53 = vsub.f32 %v42, %v50
    %v54 = vand.u32 2147483647, %v53
    %v55 = vsub.f32 0.0, %v54
    %v56 = vmul.f32 %v55, 1.442695
    %v57 = vpow.pop %v56
    %v58 = vadd.f32 %v57, 1.0
    %v59 = vlog2.pop %v58
    %v60 = vmul.f32 %v59, 0.6931472
    %v61 = vadd.f32 %v52, %v60
    %vm62 = vcmp.eq.s32.totalorder %v45, 0
    %v64 = vunpack.c.l.s4 1966171168
    %v65 = vunpack.c.0.s8 %v64
    %v66 = vlaneseq
    %v67 = vshrl.u32 %v66, 7
    %v68 = vsub.s32 %v65, %v67
    %v69 = vrot.slane %v42, %v68
    %v70 = vcombine.high %v69, %v69
    %v72 = vunpack.c.l.s4 1966171168
    %v73 = vunpack.c.0.s8 %v72
    %v74 = vlaneseq
    %v75 = vshrl.u32 %v74, 7
    %v76 = vsub.s32 %v73, %v75
    %v77 = vrot.slane %v70, %v76
    %v79 = vsel %vm62, %v42, %v77
    %v80 = vrot.slane %v42, 7
    %vm82 = vcmp.gt.f32.partialorder %v42, %v80
    %v83 = vsel %vm82, 1, 0
    %v84 = vsub.f32 %v61, %v79
    %vm85 = vcmp.eq.s32.totalorder %v45, 1
    %v86 = vsel %vm85, 0.0625, 1.0
    %v87 = vlaneseq
    %v88 = vshrl.u32 %v87, 7
    %v89 = vsub.s32 0, %v88
    %v90 = vrot.slane %v45, %v89
    %vm91 = vcmp.eq.s32.totalorder %v83, %v90
    %v92 = vsel %vm91, 1, 0
    %v93 = vcvt.s32.f32 %v92
    %v95 = vlaneseq
    %v96 = vshrl.u32 %v95, 7
    %v97 = vsub.s32 0, %v96
    %v98 = vrot.slane %v48, %v97
    %v100 = vmul.f32 %v93, %v98
    %v101 = vsub.f32 %v43, %v44
    %v102 = vand.u32 2147483647, %v101
    %vm103 = vcmask 1043456
    %v104 = vsel %vm103, %v102, 0.0
    %v105 = vrot.slane %v104, 4
    %v106 = vadd.f32 %v104, %v105
    %v107 = vrot.slane %v106, 2
    %v108 = vadd.f32 %v106, %v107
    %v109 = vrot.slane %v108, 1
    %v110 = vadd.f32 %v108, %v109
    %v111 = vmul.f32 %v110, %v48
    %v112 = vmul.f32 %v43, 0.5
    %v114 = vrot.slane %v112, 2
    %v116 = vsub.f32 %v43, %v114
    %v117 = vadd.f32 %v43, %v114
    %v118 = vmul.f32 %v44, 0.5
    %v120 = vrot.slane %v118, 2
    %v122 = vsub.f32 %v44, %v120
    %v123 = vadd.f32 %v44, %v120
    %v124 = vsub.f32 %v117, %v116
    %v126 = vrot.slane %v124, 1
    %v128 = vmul.f32 %v124, %v126
    %v129 = vsub.f32 %v123, %v122
    %v131 = vrot.slane %v129, 1
    %v133 = vmul.f32 %v129, %v131
    %v134 = vmin.f32 %v117, %v123
    %v135 = vmax.f32 %v116, %v122
    %v136 = vsub.f32 %v134, %v135
    %v137 = vmax.f32 %v136, 0.0
    %v139 = vrot.slane %v137, 1
    %v141 = vmul.f32 %v137, %v139
    %v142 = vadd.f32 %v128, %v133
    %v143 = vsub.f32 %v142, %v141
    %v144 = vrcp.pop %v143
    %v145 = vmul.f32 %v141, %v144
    %v146 = vmax.f32 %v117, %v123
    %v147 = vmin.f32 %v116, %v122
    %v148 = vsub.f32 %v146, %v147
    %v149 = vmax.f32 %v148, 0.0
    %v151 = vrot.slane %v149, 1
    %v153 = vmul.f32 %v149, %v151
    %v154 = vsub.f32 %v153, %v143
    %v155 = vrcp.pop %v153
    %v156 = vmul.f32 %v154, %v155
    %v157 = vsub.f32 %v145, %v156
    %v158 = vsub.f32 1.0, %v157
    %v159 = vsel %vm46, %v158, 0.0
    %v160 = vsel %vm46, %v145, 0.0
    %v161 = vmul.f32 %v86, %v84
    %v163 = vlaneseq
    %v164 = vshrl.u32 %v163, 7
    %v165 = vsub.s32 0, %v164
    %v166 = vrot.slane %v86, %v165
    %v169 = vrot.slane %v100, 7
    %v172 = vrot.slane %v111, 5
    %v175 = vlaneseq
    %v176 = vshrl.u32 %v175, 7
    %v177 = vsub.s32 0, %v176
    %v178 = vrot.slane %v159, %v177
    %v181 = vlaneseq
    %v182 = vshrl.u32 %v181, 7
    %v183 = vsub.s32 0, %v182
    %v184 = vrot.slane %v160, %v183
    %vm186 = vcmask 1040384
    %v187 = vsel %vm186, %v161, %v166
    %vm188 = vcmask 1041408
    %v189 = vsel %vm188, %v187, %v169
    %vm190 = vcmask 1042432
    %v191 = vsel %vm190, %v189, %v172
    %v192 = vsel %vm103, %v191, %v178
    %vm193 = vcmask 1044480
    %v194 = vsel %vm193, %v192, %v184
    %vm195 = vcmask 1045504
    %v196 = vsel %vm195, %v194, %v98
    %vm197 = vcmask 1046528
    %v198 = vsel %vm197, %v196, 0.0
    %199 = vadd.xlane.f32.xlu0 %v198
    %v200 = vpop.xlane.xlu0 %199
    %v201 = vmax.f32 %v200, 1.0
    %v202 = vrcp.pop %v201
    %v203 = vmul.f32 1.0, %v202
    %v205 = vrot.slane %v200, 1
    %v207 = vrcp.pop %v205
    %v208 = vmul.f32 %v200, %v207
    %v209 = vmul.f32 %v200, 100.0
    %v211 = vrot.slane %v203, 4
    %v213 = vmul.f32 %v209, %v211
    %v214 = vsub.f32 100.0, %v213
    %v215 = vrot.slane %v203, 3
    %v217 = vmul.f32 %v200, %v215
    %v218 = vrot.slane %v203, 2
    %v220 = vmul.f32 %v200, %v218
    %v221 = vrot.slane %v203, 1
    %v223 = vmul.f32 %v200, %v221
    %v224 = vlaneseq
    %v225 = vand.u32 %v224, 127
    %vm226 = vcmp.eq.s32.totalorder %v225, 0
    %s228 = vtos %v208
    %v229 = vstv %s228
    %v231 = vsel %vm226, %v229, 0.0
    %vm232 = vcmp.eq.s32.totalorder %v225, 1
    %v234 = vrot.slane %v214, 2
    %s235 = vtos %v234
    %v236 = vstv %s235
    %v238 = vsel %vm232, %v236, %v231
    %vm239 = vcmp.eq.s32.totalorder %v225, 2
    %v241 = vrot.slane %v217, 3
    %s242 = vtos %v241
    %v243 = vstv %s242
    %v245 = vsel %vm239, %v243, %v238
    %vm246 = vcmp.eq.s32.totalorder %v225, 3
    %v248 = vrot.slane %v220, 4
    %s249 = vtos %v248
    %v250 = vstv %s249
    %v252 = vsel %vm246, %v250, %v245
    %vm253 = vcmp.eq.s32.totalorder %v225, 4
    %v255 = vrot.slane %v223, 5
    %s256 = vtos %v255
    %v257 = vstv %s256
    %v259 = vsel %vm253, %v257, %v252
    %260 = vst [vmem:[#allocation7] sm:$0xff] %v259
    // Predicated region
    $region26: #{tpu_custom_call.1} parent=1 // pred_check
      _
    $region27: #{tpu_custom_call.1} parent=1 // pred_check_branch
      %262 = sbr.rel (0) target = $region29
    $region28: #{tpu_custom_call.1} parent=1 // pred_region
      %s264 = ssub.s32 128, 128
      %265 = vsyncadd [#allocation4], %s264
      %s267 = sshll.u32 [#allocation7], 4
      %s268 = int_to_ptr.vmem [resolvable:$true] %s267
      %270 = dma.vmem_to_hbm [thread:$0]  %s268, 128, %s4, [#allocation4]
    $region29: #{tpu_custom_call.1} parent=1 // pred_fallthru
      _
    // Predicated region
    $region30: #{tpu_custom_call.1} parent=1 // pred_check
      _
    $region31: #{tpu_custom_call.1} parent=1 // pred_check_branch
      %272 = sbr.rel (0) target = $region33
    $region32: #{tpu_custom_call.1} parent=1 // pred_region
      %273 = dma.done [#allocation4], 128
    $region33: #{tpu_custom_call.1} parent=1 // pred_fallthru
      _
    %274 = vsyncpa [#allocation3], 1
    %275 = vsyncpa [#allocation6], 1
    %276 = vsyncpa [#allocation4], 1

</llo_original>
